<compile_context>
chip_gen: v6e
topology: v6e:2x2x1
jax: 0.10.0
libtpu: 0.0.40
codegen_flags: <defaults>
</compile_context>

<pallas_src>
import functools

import jax
import jax.numpy as jnp
from jax.experimental import pallas as pl
from jax.experimental.pallas import tpu as pltpu


def _round_up(x, m):
    return ((x + m - 1) // m) * m


def _conv_kernel(act, patch_ref, w_ref, shift_ref, o_ref):
    """Grid = (M_tiles,). One fused matmul per tile; epilogue = +shift (+ReLU)."""
    out = jnp.dot(patch_ref[...], w_ref[...],
                  preferred_element_type=jnp.float32)
    out = out + shift_ref[...]
    if act:  # static python flag -> ReLU only traced when requested
        out = jnp.maximum(out, 0.0)
    o_ref[...] = out.astype(o_ref.dtype)


def conv2d_pallas(x, weight, bias=None, *, stride=1, padding=0,
                  bn_params=None, act=False, tm=512,
                  compute_dtype=jnp.bfloat16):
    """Conv2d (+ optional eval-mode BN fold, + optional ReLU).

    x:      (N, Cin, H, W)  NCHW, float32
    weight: (Cout, Cin, KH, KW)  (PyTorch OIHW)
    bias:   (Cout,) or None
    bn_params: optional (gamma, beta, running_mean, running_var, eps)
    returns (N, Cout, H_out, W_out) NCHW, float32
    """
    N, Cin, H, W = x.shape
    Cout, _, KH, KW = weight.shape
    s, p = int(stride), int(padding)
    H_out = (H + 2 * p - KH) // s + 1
    W_out = (W + 2 * p - KW) // s + 1

    M = N * H_out * W_out
    K = Cin * KH * KW
    Cout_pad = _round_up(Cout, 128)        # lane-dense (unmasked) output stores

    # ---- fused im2col (written/read once, not per-tap) --------------------
    x_nhwc = jnp.transpose(x, (0, 2, 3, 1))
    if p > 0:
        x_nhwc = jnp.pad(x_nhwc, ((0, 0), (p, p), (p, p), (0, 0)))
    cols = []
    for kh in range(KH):
        for kw in range(KW):
            cols.append(x_nhwc[:, kh:kh + s * H_out:s, kw:kw + s * W_out:s, :])
    # K layout = (kh, kw, cin) -> must match the weight reshape below
    patches = jnp.concatenate(cols, axis=-1).astype(compute_dtype)
    patches = patches.reshape(M, K)

    # ---- weight (K, Cout_pad), BN/bias folded into scale & shift -----------
    b = bias if bias is not None else jnp.zeros((Cout,), jnp.float32)
    if bn_params is not None:
        gamma, beta, mean, var, eps = bn_params
        scale = gamma / jnp.sqrt(var + eps)
        shift = beta + scale * (b - mean)
    else:
        scale = jnp.ones((Cout,), jnp.float32)
        shift = b
    w_mat = jnp.transpose(weight, (2, 3, 1, 0)).reshape(K, Cout)
    w_mat = w_mat * scale[None, :]                       # BN scale folded in
    if Cout_pad != Cout:
        w_mat = jnp.pad(w_mat, ((0, 0), (0, Cout_pad - Cout)))
        shift = jnp.pad(shift, (0, Cout_pad - Cout))
    w_mat = w_mat.astype(compute_dtype)
    shift = shift.reshape(1, Cout_pad).astype(jnp.float32)

    # ---- tiling: big tiles, >= 2 M tiles when possible, fit VMEM -----------
    tm_eff = max(8, min(int(tm), _round_up(-(-M // 2), 8)))
    itemsize = jnp.dtype(compute_dtype).itemsize

    def vmem_need(t):
        return (2 * t * K * itemsize            # double-buffered activation tiles
                + K * Cout_pad * itemsize       # resident weight
                + 2 * Cout_pad * 4              # shift
                + 2 * t * Cout_pad * 4)         # double-buffered output tiles

    budget = 48 << 20                           # conservative for v7x (64 MiB VMEM)
    while tm_eff > 8 and vmem_need(tm_eff) > budget:
        tm_eff = max(8, _round_up(tm_eff // 2, 8))

    M_pad = _round_up(M, tm_eff)
    if M_pad != M:  # only pad the remainder rows (no unconditional full copy)
        patches = jnp.pad(patches, ((0, M_pad - M), (0, 0)))
    grid = (M_pad // tm_eff,)

    vmem_limit = int(min(64 << 20, max(32 << 20, 2 * vmem_need(tm_eff))))

    out_flat = pl.pallas_call(
        functools.partial(_conv_kernel, act),
        out_shape=jax.ShapeDtypeStruct((M_pad, Cout_pad), jnp.float32),
        grid_spec=pltpu.PrefetchScalarGridSpec(
            num_scalar_prefetch=0,
            grid=grid,
            in_specs=[
                pl.BlockSpec((tm_eff, K), lambda i: (i, 0)),
                pl.BlockSpec((K, Cout_pad), lambda i: (0, 0)),   # resident weight
                pl.BlockSpec((1, Cout_pad), lambda i: (0, 0)),   # resident shift
            ],
            out_specs=pl.BlockSpec((tm_eff, Cout_pad), lambda i: (i, 0)),
        ),
        compiler_params=pltpu.CompilerParams(
            dimension_semantics=("parallel",),
            vmem_limit_bytes=vmem_limit),
    )(patches, w_mat, shift)

    out = out_flat[:M, :Cout].reshape(N, H_out, W_out, Cout)
    return jnp.transpose(out, (0, 3, 1, 2))  # back to NCHW


class ConvPallas:
    """Mirror of the PyTorch `Conv` module (Conv2d [+BN] [+ReLU])."""

    def __init__(self, input_channels, n_feats, kernel_size, stride=1,
                 padding=0, bias=True, bn=False, act=False, *, key):
        self.stride, self.padding, self.act, self.bn = stride, padding, act, bn
        kw, kb = jax.random.split(key)
        fan_in = input_channels * kernel_size * kernel_size
        bound = 1.0 / jnp.sqrt(fan_in)
        # deterministic synthetic init (kaiming-uniform-like, as nn.Conv2d)
        self.weight = jax.random.uniform(
            kw, (n_feats, input_channels, kernel_size, kernel_size),
            jnp.float32, -bound, bound)
        self.bias = (jax.random.uniform(kb, (n_feats,), jnp.float32,
                                        -bound, bound) if bias else None)
        if bn:
            # eval-mode BatchNorm2d (default init running stats) folded in
            self.bn_params = (jnp.ones((n_feats,), jnp.float32),
                              jnp.zeros((n_feats,), jnp.float32),
                              jnp.zeros((n_feats,), jnp.float32),
                              jnp.ones((n_feats,), jnp.float32),
                              1e-5)
        else:
            self.bn_params = None
        # TODO(synk): training-mode BatchNorm (batch statistics) not implemented;
        # only the eval-mode (running-stat) fold is supported.

    def __call__(self, x):
        return conv2d_pallas(x, self.weight, self.bias,
                             stride=self.stride, padding=self.padding,
                             bn_params=self.bn_params, act=self.act)


def _reference(x, conv, *, stride, padding):
    """Pure-JAX reference with the same bf16 input rounding as the kernel."""
    xq = x.astype(jnp.bfloat16).astype(jnp.float32)
    wq = conv.weight.astype(jnp.bfloat16).astype(jnp.float32)
    y = jax.lax.conv_general_dilated(
        xq, wq, window_strides=(stride, stride),
        padding=[(padding, padding), (padding, padding)],
        dimension_numbers=("NCHW", "OIHW", "NCHW"))
    if conv.bias is not None:
        y = y + conv.bias.reshape(1, -1, 1, 1)
    if conv.bn_params is not None:
        gamma, beta, mean, var, eps = conv.bn_params
        inv = gamma / jnp.sqrt(var + eps)
        y = (y - mean.reshape(1, -1, 1, 1)) * inv.reshape(1, -1, 1, 1) \
            + beta.reshape(1, -1, 1, 1)
    if conv.act:
        y = jnp.maximum(y, 0.0)
    return y


if __name__ == "__main__":
    key = jax.random.PRNGKey(0)
    kx, kp1, kp2 = jax.random.split(key, 3)

    # small shapes consistent with the module: batch=2, Cin=4, 16x16 spatial
    N, Cin, H, W = 2, 4, 16, 16
    n_feats, ksize, stride, padding = 8, 3, 1, 1

    x = jax.random.normal(kx, (N, Cin, H, W), jnp.float32)

    # Config 1: Conv2d + bias (no BN, no ReLU)
    conv1 = ConvPallas(Cin, n_feats, ksize, stride=stride, padding=padding,
                       bias=True, bn=False, act=False, key=kp1)
    y1 = jax.block_until_ready(conv1(x))
    ref1 = _reference(x, conv1, stride=stride, padding=padding)
    assert y1.shape == (N, n_feats, H, W), y1.shape
    assert jnp.allclose(y1, ref1, atol=1e-3, rtol=1e-3), float(
        jnp.max(jnp.abs(y1 - ref1)))

    # Config 2: Conv2d + bias + eval-mode BN + ReLU
    conv2 = ConvPallas(Cin, n_feats, ksize, stride=stride, padding=padding,
                       bias=True, bn=True, act=True, key=kp2)
    y2 = jax.block_until_ready(conv2(x))
    ref2 = _reference(x, conv2, stride=stride, padding=padding)
    assert y2.shape == (N, n_feats, H, W), y2.shape
    assert jnp.allclose(y2, ref2, atol=1e-3, rtol=1e-3), float(
        jnp.max(jnp.abs(y2 - ref2)))

    print("KERNEL_OK")
</pallas_src>

<mosaic_0001>
module attributes {stable_mosaic.version = 11 : i64} {
  func.func @_conv_kernel(%arg0: i32, %arg1: memref<256x36xbf16, #tpu.memory_space<vmem>>, %arg2: memref<36x128xbf16, #tpu.memory_space<vmem>>, %arg3: memref<1x128xf32, #tpu.memory_space<vmem>>, %arg4: memref<256x128xf32, #tpu.memory_space<vmem>>) attributes {dimension_semantics = [#tpu.dimension_semantics<parallel>], iteration_bounds = array<i64: 2>, scalar_prefetch = 0 : i64, scratch_operands = 0 : i64, tpu.core_type = #tpu.core_type<tc>, window_params = [{transform_indices = @transform_0, window_bounds = array<i64: 256, 36>}, {pipeline_mode = #tpu.pipeline_mode<synchronous>, transform_indices = @transform_1, window_bounds = array<i64: 36, 128>}, {pipeline_mode = #tpu.pipeline_mode<synchronous>, transform_indices = @transform_2, window_bounds = array<i64: 1, 128>}, {transform_indices = @transform_3, window_bounds = array<i64: 256, 128>}]} {
    %c0 = arith.constant 0 : index
    %c0_0 = arith.constant 0 : index
    %0 = vector.load %arg1[%c0, %c0_0] : memref<256x36xbf16, #tpu.memory_space<vmem>>, vector<256x36xbf16>
    %c0_1 = arith.constant 0 : index
    %c0_2 = arith.constant 0 : index
    %1 = vector.load %arg2[%c0_1, %c0_2] : memref<36x128xbf16, #tpu.memory_space<vmem>>, vector<36x128xbf16>
    %cst = arith.constant dense<0.000000e+00> : vector<256x128xf32>
    %2 = tpu.matmul %0, %1, %cst {dimension_numbers = #tpu.dot_dimension_numbers<[1], [0], [0], [1], [0, 0, 1, 1], [], []>} : vector<256x36xbf16>, vector<36x128xbf16>, vector<256x128xf32> -> vector<256x128xf32>
    %c0_3 = arith.constant 0 : index
    %c0_4 = arith.constant 0 : index
    %3 = vector.load %arg3[%c0_3, %c0_4] : memref<1x128xf32, #tpu.memory_space<vmem>>, vector<1x128xf32>
    %4 = vector.broadcast %3 : vector<1x128xf32> to vector<256x128xf32>
    %5 = arith.addf %2, %4 : vector<256x128xf32>
    %c0_5 = arith.constant 0 : index
    %c0_6 = arith.constant 0 : index
    %6 = vector.load %arg4[%c0_5, %c0_6] : memref<256x128xf32, #tpu.memory_space<vmem>>, vector<256x128xf32>
    tpu.vector_store %arg4[%c0_5, %c0_6], %5 {strides = array<i32>} : memref<256x128xf32, #tpu.memory_space<vmem>>, vector<256x128xf32>,
    return
  }
  func.func @transform_0(%arg0: i32) -> (i32, i32) {
    %c0_i32 = arith.constant 0 : i32
    %c0_i32_0 = arith.constant 0 : i32
    return %arg0, %c0_i32 : i32, i32
  }
  func.func @transform_1(%arg0: i32) -> (i32, i32) {
    %c0_i32 = arith.constant 0 : i32
    %c0_i32_0 = arith.constant 0 : i32
    %c0_i32_1 = arith.constant 0 : i32
    return %c0_i32, %c0_i32_0 : i32, i32
  }
  func.func @transform_2(%arg0: i32) -> (i32, i32) {
    %c0_i32 = arith.constant 0 : i32
    %c0_i32_0 = arith.constant 0 : i32
    %c0_i32_1 = arith.constant 0 : i32
    return %c0_i32, %c0_i32_0 : i32, i32
  }
  func.func @transform_3(%arg0: i32) -> (i32, i32) {
    %c0_i32 = arith.constant 0 : i32
    %c0_i32_0 = arith.constant 0 : i32
    return %arg0, %c0_i32 : i32, i32
  }
}

</mosaic_0001>

<llo_original>
// kernel: tpu_custom_call.1
$region0: #{tpu_custom_call.1}
  #allocation0 [shape = 'u32[]', space=smem, size = 0x4, offset = 0x4, fixed_abs, tag = 'smem constant byte address 0x4 - core index']
  #allocation1 [shape = 'u32[144,128]{1,0:T(1,128)}', space=vmem, size = 0x12000, scoped, tag = 'internal scratch']
  %s0 = inlined_call_operand.vmem [shape: bf16[512,36], index: 0, kind: input, shape index: {}]
  %s1 = inlined_call_operand.vmem [shape: bf16[36,128], index: 1, kind: input, shape index: {}]
  %s2 = inlined_call_operand.vmem [shape: f32[1,128], index: 2, kind: input, shape index: {}]
  %s3 = inlined_call_operand.hbm [shape: f32[512,128], index: 3, kind: output, shape index: {}]
  %s4 = sld [smem:[#allocation0]]
  $region45: #{tpu_custom_call.1} parent=0
    _
  %s6 = ssub.s32 1, %s4
  %s7 = scalar_select 0, %s6, %s4
  $region1: #{tpu_custom_call.1} parent=0
    #allocation2 [shape = 'u8[262144]{0}', space=vmem, size = 0x40000, scoped, tag = 'output window, operand 0']
    #allocation3 [shape = 's32[2]{0}', space=sflag, size = 0x8, scoped, tag = 'scoped memory for tpu_custom_call.1']
    %8 = vsyncpa [#allocation3], 0
    %s9 = scalar_lea.sflag [#allocation3], 1
    %10 = vsyncpa %s9, 0
    loop: start=0, step=1, limit=4
    $region2: #{tpu_custom_call.1} parent=1 // loop_pre_header
      _
    $region3: #{tpu_custom_call.1} parent=1 // loop_header
      %s12 = sphi 0, %s16
      %p13 = scmp.ge.s32.totalorder %s12, 4
      %s22 = sphi 0, %s24
      %s25 = sphi 0, %s22
      %s26 = sphi 0, %s25
      %s42 = sphi 0, %s26
      %s46 = sphi 0, %s46
      %s48 = sphi 0, %s46
      %s49 = sphi 0, %s48
      %s63 = sphi 0, %s49
      %s67 = sphi 0, %s67
      %s69 = sphi 0, %s67
      %s70 = sphi 0, %s69
      %s84 = sphi 0, %s70
      %s90 = sphi 0, %s92
      %s93 = sphi 0, %s90
      %s94 = sphi 0, %s93
      %s110 = sphi 0, %s94
    $region4: #{tpu_custom_call.1} parent=1 // loop_header_branch
      %15 = sbr.rel (%p13) target = $region8
    $region5: #{tpu_custom_call.1} parent=1 // loop_body
      %s17 = ssub.s32 %s12, 1
      %s18 = ssub.s32 %s12, 2
      %s19 = sadd.s32 %s12, 1
      %s20 = ssub.s32 %s12, %s19
      %p21 = scmp.eq.s32.totalorder %s20, 0
      %s23 = sadd.s32 %s22, 1
      %s24 = scalar_select %p21, %s22, %s23
      %p27 = pneg %p21
      %p28 = scmp.eq.s32.totalorder %s12, 1
      %p29 = por %p27, %p28
      %p30 = scmp.ne.s32.totalorder %s22, %s25
      %p31 = scmp.eq.s32.totalorder %s12, 0
      %p32 = por %p30, %p31
      %p33 = scmp.ne.s32.totalorder %s22, %s25
      %p34 = scmp.eq.s32.totalorder %s17, 1
      %p35 = por %p33, %p34
      %p36 = scmp.ne.s32.totalorder %s25, %s26
      %p37 = scmp.eq.s32.totalorder %s17, 0
      %p38 = por %p36, %p37
      %p39 = scmp.ne.s32.totalorder %s25, %s26
      %p40 = scmp.eq.s32.totalorder %s18, 1
      %p41 = por %p39, %p40
      %p43 = scmp.ne.s32.totalorder %s26, %s42
      %p44 = scmp.eq.s32.totalorder %s18, 0
      %p45 = por %p43, %p44
      %s47 = sadd.s32 %s46, 1
      %p50 = scmp.eq.s32.totalorder %s12, 1
      %p51 = scmp.ne.s32.totalorder %s46, %s48
      %p52 = scmp.eq.s32.totalorder %s12, 0
      %p53 = por %p51, %p52
      %p54 = scmp.ne.s32.totalorder %s46, %s48
      %p55 = scmp.eq.s32.totalorder %s17, 1
      %p56 = por %p54, %p55
      %p57 = scmp.ne.s32.totalorder %s48, %s49
      %p58 = scmp.eq.s32.totalorder %s17, 0
      %p59 = por %p57, %p58
      %p60 = scmp.ne.s32.totalorder %s48, %s49
      %p61 = scmp.eq.s32.totalorder %s18, 1
      %p62 = por %p60, %p61
      %p64 = scmp.ne.s32.totalorder %s49, %s63
      %p65 = scmp.eq.s32.totalorder %s18, 0
      %p66 = por %p64, %p65
      %s68 = sadd.s32 %s67, 1
      %p71 = scmp.eq.s32.totalorder %s12, 1
      %p72 = scmp.ne.s32.totalorder %s67, %s69
      %p73 = scmp.eq.s32.totalorder %s12, 0
      %p74 = por %p72, %p73
      %p75 = scmp.ne.s32.totalorder %s67, %s69
      %p76 = scmp.eq.s32.totalorder %s17, 1
      %p77 = por %p75, %p76
      %p78 = scmp.ne.s32.totalorder %s69, %s70
      %p79 = scmp.eq.s32.totalorder %s17, 0
      %p80 = por %p78, %p79
      %p81 = scmp.ne.s32.totalorder %s69, %s70
      %p82 = scmp.eq.s32.totalorder %s18, 1
      %p83 = por %p81, %p82
      %p85 = scmp.ne.s32.totalorder %s70, %s84
      %p86 = scmp.eq.s32.totalorder %s18, 0
      %p87 = por %p85, %p86
      %s88 = ssub.s32 %s12, %s19
      %p89 = scmp.eq.s32.totalorder %s88, 0
      %s91 = sadd.s32 %s90, 1
      %s92 = scalar_select %p89, %s90, %s91
      %p95 = pneg %p89
      %p96 = scmp.eq.s32.totalorder %s12, 1
      %p97 = por %p95, %p96
      %p98 = scmp.ne.s32.totalorder %s90, %s93
      %p99 = scmp.eq.s32.totalorder %s12, 0
      %p100 = por %p98, %p99
      %p101 = scmp.ne.s32.totalorder %s90, %s93
      %p102 = scmp.eq.s32.totalorder %s17, 1
      %p103 = por %p101, %p102
      %p104 = scmp.ne.s32.totalorder %s93, %s94
      %p105 = scmp.eq.s32.totalorder %s17, 0
      %p106 = por %p104, %p105
      %p107 = scmp.ne.s32.totalorder %s93, %s94
      %p108 = scmp.eq.s32.totalorder %s18, 1
      %p109 = por %p107, %p108
      %p111 = scmp.ne.s32.totalorder %s94, %s110
      %p112 = scmp.eq.s32.totalorder %s18, 0
      %p113 = por %p111, %p112
      %p114 = scmp.le.s32.totalorder 1, %s12
      %p115 = scmp.lt.s32.totalorder %s12, 3
      %p116 = pnand %p114, %p115
      %p117 = pneg %p116
      // Predicated region
      $region9: #{tpu_custom_call.1} parent=5 // pred_check
        _
      $region10: #{tpu_custom_call.1} parent=5 // pred_check_branch
        %119 = sbr.rel (%p116) target = $region12
      $region11: #{tpu_custom_call.1} parent=5 // pred_region
        %s120 = ssub.s32 %s12, 1
        // Predicated region
        $region13: #{tpu_custom_call.1} parent=11 // pred_check
          %p121 = pneg %p59
        $region14: #{tpu_custom_call.1} parent=11 // pred_check_branch
          %123 = sbr.rel (%p121) target = $region16
        $region15: #{tpu_custom_call.1} parent=11 // pred_region
          _
        $region16: #{tpu_custom_call.1} parent=11 // pred_fallthru
          _
        // Predicated region
        $region17: #{tpu_custom_call.1} parent=11 // pred_check
          %p124 = pneg %p80
        $region18: #{tpu_custom_call.1} parent=11 // pred_check_branch
          %126 = sbr.rel (%p124) target = $region20
        $region19: #{tpu_custom_call.1} parent=11 // pred_region
          _
        $region20: #{tpu_custom_call.1} parent=11 // pred_fallthru
          _
      $region12: #{tpu_custom_call.1} parent=5 // pred_fallthru
        _
      %p127 = scmp.lt.s32.totalorder %s12, 2
      // Predicated region
      $region21: #{tpu_custom_call.1} parent=5 // pred_check
        %p128 = pneg %p127
      $region22: #{tpu_custom_call.1} parent=5 // pred_check_branch
        %130 = sbr.rel (%p128) target = $region24
      $region23: #{tpu_custom_call.1} parent=5 // pred_region
        // Predicated region
        $region25: #{tpu_custom_call.1} parent=23 // pred_check
          %p131 = pneg %p32
        $region26: #{tpu_custom_call.1} parent=23 // pred_check_branch
          %133 = sbr.rel (%p131) target = $region28
        $region27: #{tpu_custom_call.1} parent=23 // pred_region
          %s134 = smul.u32 32, %s12
          %p135 = scmp.lt.s32.totalorder %s134, 63
          %s136 = scalar_select %p135, %s134, 63
          %s137 = smul.addr %s136, 4
          %s138 = scalar_lea.vmem %s0, %s137
          %s139 = smul.u32 32, %s12
        $region28: #{tpu_custom_call.1} parent=23 // pred_fallthru
          _
      $region24: #{tpu_custom_call.1} parent=5 // pred_fallthru
        _
      %p140 = scmp.le.s32.totalorder 1, %s12
      %p141 = scmp.lt.s32.totalorder %s12, 3
      %p142 = pnand %p140, %p141
      %p143 = pneg %p142
      // Predicated region
      $region29: #{tpu_custom_call.1} parent=5 // pred_check
        _
      $region30: #{tpu_custom_call.1} parent=5 // pred_check_branch
        %145 = sbr.rel (%p142) target = $region32
      $region31: #{tpu_custom_call.1} parent=5 // pred_region
        %s146 = ssub.s32 %s12, 1
        %s147 = smul.u32 32, %s17
        %p148 = scmp.lt.s32.totalorder %s147, 63
        %s149 = scalar_select %p148, %s147, 63
        %s150 = smul.addr %s149, 4
        %s151 = scalar_lea.vmem %s0, %s150
        %p152 = pneg %p38
        %p153 = pneg %p35
        %p154 = pneg %p59
        %p155 = pneg %p56
        %p156 = pneg %p80
        %p157 = pneg %p77
        %p158 = pneg %p106
        %p159 = pneg %p103
        %s160 = sand.u32 %s93, 1
        %s161 = scalar_lea.sflag [#allocation3], %s160
        %s162 = sand.u32 %s93, 1
        %s163 = smul.addr %s162, 256
        %s164 = scalar_lea.vmem [#allocation2], %s163
        %s165 = smul.u32 32, %s17
        %p166 = scmp.lt.s32.totalorder %s165, 63
        %s167 = scalar_select %p166, %s165, 63
        %s168 = smul.addr %s167, 4
        %s169 = scalar_lea.vmem %s0, %s168
        %s170 = smul.u32 32, %s17
        %s171 = smul.u32 32, %s17
        %v173 = vld [vmem:[%s169] sm:$0xf]
        %v174 = vld [vmem:[%s169 + $0x4] sm:$0xf]
        %v175 = vld [vmem:[%s169 + $0x8] sm:$0xf]
        %v176 = vld [vmem:[%s169 + $0xc] sm:$0xf]
        %v177 = vld [vmem:[%s169 + $0x10] sm:$0xf]
        %v178 = vld [vmem:[%s169 + $0x14] sm:$0xf]
        %v179 = vld [vmem:[%s169 + $0x18] sm:$0xf]
        %v180 = vld [vmem:[%s169 + $0x1c] sm:$0xf]
        %v181 = vld [vmem:[%s169 + $0x20] sm:$0xf]
        %v182 = vld [vmem:[%s169 + $0x24] sm:$0xf]
        %v183 = vld [vmem:[%s169 + $0x28] sm:$0xf]
        %v184 = vld [vmem:[%s169 + $0x2c] sm:$0xf]
        %v185 = vld [vmem:[%s169 + $0x30] sm:$0xf]
        %v186 = vld [vmem:[%s169 + $0x34] sm:$0xf]
        %v187 = vld [vmem:[%s169 + $0x38] sm:$0xf]
        %v188 = vld [vmem:[%s169 + $0x3c] sm:$0xf]
        %v189 = vld [vmem:[%s169 + $0x40] sm:$0xf]
        %v190 = vld [vmem:[%s169 + $0x44] sm:$0xf]
        %v191 = vld [vmem:[%s169 + $0x48] sm:$0xf]
        %v192 = vld [vmem:[%s169 + $0x4c] sm:$0xf]
        %v193 = vld [vmem:[%s169 + $0x50] sm:$0xf]
        %v194 = vld [vmem:[%s169 + $0x54] sm:$0xf]
        %v195 = vld [vmem:[%s169 + $0x58] sm:$0xf]
        %v196 = vld [vmem:[%s169 + $0x5c] sm:$0xf]
        %v197 = vld [vmem:[%s169 + $0x60] sm:$0xf]
        %v198 = vld [vmem:[%s169 + $0x64] sm:$0xf]
        %v199 = vld [vmem:[%s169 + $0x68] sm:$0xf]
        %v200 = vld [vmem:[%s169 + $0x6c] sm:$0xf]
        %v201 = vld [vmem:[%s169 + $0x70] sm:$0xf]
        %v202 = vld [vmem:[%s169 + $0x74] sm:$0xf]
        %v203 = vld [vmem:[%s169 + $0x78] sm:$0xf]
        %v204 = vld [vmem:[%s169 + $0x7c] sm:$0xf]
        %v205 = vld [vmem:[%s1] sm:$0xf]
        %v206 = vld [vmem:[%s1 + $0x4] sm:$0xf]
        %v207 = vld [vmem:[%s1 + $0x8] sm:$0xf]
        %v208 = vld [vmem:[%s1 + $0xc] sm:$0xf]
        %v209 = vld [vmem:[%s1 + $0x10] sm:$0x3]
        %v210 = vld [vmem:[%s2] sm:$0x1]
        %v212 = vlaneseq
        %v213 = vshrl.u32 %v212, 7
        %v214 = vsub.s32 0, %v213
        %v215 = vrot.slane %v210, %v214
        %v249 = vunpack.c.l.b16 %v173
        %v250 = vunpack.c.l.b16 %v174
        %v251 = vunpack.c.l.b16 %v175
        %v252 = vunpack.c.l.b16 %v176
        %v253 = vunpack.c.l.b16 %v177
        %v254 = vunpack.c.l.b16 %v178
        %v255 = vunpack.c.l.b16 %v179
        %v256 = vunpack.c.l.b16 %v180
        %v257 = vunpack.c.l.b16 %v181
        %v258 = vunpack.c.l.b16 %v182
        %v259 = vunpack.c.l.b16 %v183
        %v260 = vunpack.c.l.b16 %v184
        %v261 = vunpack.c.l.b16 %v185
        %v262 = vunpack.c.l.b16 %v186
        %v263 = vunpack.c.l.b16 %v187
        %v264 = vunpack.c.l.b16 %v188
        %v265 = vunpack.c.l.b16 %v189
        %v266 = vunpack.c.l.b16 %v190
        %v267 = vunpack.c.l.b16 %v191
        %v268 = vunpack.c.l.b16 %v192
        %v269 = vunpack.c.l.b16 %v193
        %v270 = vunpack.c.l.b16 %v194
        %v271 = vunpack.c.l.b16 %v195
        %v272 = vunpack.c.l.b16 %v196
        %v273 = vunpack.c.l.b16 %v197
        %v274 = vunpack.c.l.b16 %v198
        %v275 = vunpack.c.l.b16 %v199
        %v276 = vunpack.c.l.b16 %v200
        %v277 = vunpack.c.l.b16 %v201
        %v278 = vunpack.c.l.b16 %v202
        %v279 = vunpack.c.l.b16 %v203
        %v280 = vunpack.c.l.b16 %v204
        %v281 = vpack.c.b16 %v250, %v249
        %v282 = vpack.c.b16 %v252, %v251
        %v283 = vpack.c.b16 %v254, %v253
        %v284 = vpack.c.b16 %v256, %v255
        %v285 = vpack.c.b16 %v258, %v257
        %v286 = vpack.c.b16 %v260, %v259
        %v287 = vpack.c.b16 %v262, %v261
        %v288 = vpack.c.b16 %v264, %v263
        %v289 = vpack.c.b16 %v266, %v265
        %v290 = vpack.c.b16 %v268, %v267
        %v291 = vpack.c.b16 %v270, %v269
        %v292 = vpack.c.b16 %v272, %v271
        %v293 = vpack.c.b16 %v274, %v273
        %v294 = vpack.c.b16 %v276, %v275
        %v295 = vpack.c.b16 %v278, %v277
        %v296 = vpack.c.b16 %v280, %v279
        %v302 = vunpack.c.l.b16 %v205
        %v303 = vunpack.c.l.b16 %v206
        %v304 = vunpack.c.l.b16 %v207
        %v305 = vunpack.c.l.b16 %v208
        %v306 = vunpack.c.l.b16 %v209
        %v307 = vpack.c.b16 %v303, %v302
        %v308 = vpack.c.b16 %v305, %v304
        %v309 = vpack.c.b16 %v306, %v306
        %vm312 = vcmask 293888
        %v314 = vsel %vm312, %v281, 0
        %v317 = vsel %vm312, %v282, 0
        %v320 = vsel %vm312, %v283, 0
        %v323 = vsel %vm312, %v284, 0
        %v326 = vsel %vm312, %v285, 0
        %v329 = vsel %vm312, %v286, 0
        %v332 = vsel %vm312, %v287, 0
        %v335 = vsel %vm312, %v288, 0
        %v338 = vsel %vm312, %v289, 0
        %v341 = vsel %vm312, %v290, 0
        %v344 = vsel %vm312, %v291, 0
        %v347 = vsel %vm312, %v292, 0
        %v350 = vsel %vm312, %v293, 0
        %v353 = vsel %vm312, %v294, 0
        %v356 = vsel %vm312, %v295, 0
        %v359 = vsel %vm312, %v296, 0
        %vm361 = vcmask 1041408
        %v363 = vsel %vm361, %v309, 0
        %365 = vmatprep.subr.bf16.mxu0 0
        %366 = vmatpush1.bf16.msra.mxu0 0
        %367 = vmatprep.subr.bf16.mxu0 0
        %368 = vmatpush1.bf16.msra.mxu0 0
        %369 = vmatprep.subr.bf16.mxu0 0
        %370 = vmatpush1.bf16.msra.mxu0 0
        %371 = vmatprep.subr.bf16.mxu0 0
        %372 = vmatpush1.bf16.msra.mxu0 0
        %373 = vmatprep.subr.bf16.mxu0 0
        %374 = vmatpush1.bf16.msra.mxu0 0
        %375 = vmatprep.subr.bf16.mxu0 0
        %376 = vmatpush1.bf16.msra.mxu0 %v363
        %377 = vmatprep.subr.bf16.mxu0 0
        %378 = vmatpush1.bf16.msra.mxu0 %v308
        %379 = vmatprep.subr.bf16.mxu0 0
        %380 = vmatpush1.bf16.msra.mxu0 %v307
        %381 = vmatprep.subr.bf16.mxu0 0
        %382 = vmatpush2.bf16.msra.mxu0 0
        %383 = vmatprep.subr.bf16.mxu0 0
        %384 = vmatpush2.bf16.msra.mxu0 0
        %385 = vmatprep.subr.bf16.mxu0 0
        %386 = vmatpush2.bf16.msra.mxu0 0
        %387 = vmatprep.subr.bf16.mxu0 0
        %388 = vmatpush2.bf16.msra.mxu0 0
        %389 = vmatprep.subr.bf16.mxu0 0
        %390 = vmatpush2.bf16.msra.mxu0 0
        %391 = vmatprep.subr.bf16.mxu0 0
        %392 = vmatpush2.bf16.msra.mxu0 0
        %393 = vmatprep.subr.bf16.mxu0 0
        %394 = vmatpush2.bf16.msra.mxu0 0
        %395 = vmatprep.subr.bf16.mxu0 0
        %396 = vmatpush2.bf16.msra.mxu0 0
        %397 = vmatprep.mubr.bf16.mxu0 0
        %398 = vmatmul.mubr.bf16.gmra.mxu0 %v314
        %v399 = vpop.f32.mrf.mxu0
        %v400 = vadd.f32 %v215, %v399
        %v401 = vpop.f32.mrf.mxu0
        %v402 = vpop.f32.mrf.mxu0
        %v403 = vadd.f32 %v215, %v402
        %v404 = vpop.f32.mrf.mxu0
        %405 = vmatprep.mubr.bf16.mxu0 0
        %406 = vmatmul.mubr.bf16.gmra.mxu0 %v317
        %v407 = vpop.f32.mrf.mxu0
        %v408 = vadd.f32 %v215, %v407
        %v409 = vpop.f32.mrf.mxu0
        %v410 = vpop.f32.mrf.mxu0
        %v411 = vadd.f32 %v215, %v410
        %v412 = vpop.f32.mrf.mxu0
        %413 = vmatprep.mubr.bf16.mxu0 0
        %414 = vmatmul.mubr.bf16.gmra.mxu0 %v320
        %v415 = vpop.f32.mrf.mxu0
        %v416 = vadd.f32 %v215, %v415
        %v417 = vpop.f32.mrf.mxu0
        %v418 = vpop.f32.mrf.mxu0
        %v419 = vadd.f32 %v215, %v418
        %v420 = vpop.f32.mrf.mxu0
        %421 = vmatprep.mubr.bf16.mxu0 0
        %422 = vmatmul.mubr.bf16.gmra.mxu0 %v323
        %v423 = vpop.f32.mrf.mxu0
        %v424 = vadd.f32 %v215, %v423
        %v425 = vpop.f32.mrf.mxu0
        %v426 = vpop.f32.mrf.mxu0
        %v427 = vadd.f32 %v215, %v426
        %v428 = vpop.f32.mrf.mxu0
        %429 = vmatprep.mubr.bf16.mxu0 0
        %430 = vmatmul.mubr.bf16.gmra.mxu0 %v326
        %v431 = vpop.f32.mrf.mxu0
        %v432 = vadd.f32 %v215, %v431
        %v433 = vpop.f32.mrf.mxu0
        %v434 = vpop.f32.mrf.mxu0
        %v435 = vadd.f32 %v215, %v434
        %v436 = vpop.f32.mrf.mxu0
        %437 = vmatprep.mubr.bf16.mxu0 0
        %438 = vmatmul.mubr.bf16.gmra.mxu0 %v329
        %v439 = vpop.f32.mrf.mxu0
        %v440 = vadd.f32 %v215, %v439
        %v441 = vpop.f32.mrf.mxu0
        %v442 = vpop.f32.mrf.mxu0
        %v443 = vadd.f32 %v215, %v442
        %v444 = vpop.f32.mrf.mxu0
        %445 = vmatprep.mubr.bf16.mxu0 0
        %446 = vmatmul.mubr.bf16.gmra.mxu0 %v332
        %v447 = vpop.f32.mrf.mxu0
        %v448 = vadd.f32 %v215, %v447
        %v449 = vpop.f32.mrf.mxu0
        %v450 = vpop.f32.mrf.mxu0
        %v451 = vadd.f32 %v215, %v450
        %v452 = vpop.f32.mrf.mxu0
        %453 = vmatprep.mubr.bf16.mxu0 0
        %454 = vmatmul.mubr.bf16.gmra.mxu0 %v335
        %v455 = vpop.f32.mrf.mxu0
        %v456 = vadd.f32 %v215, %v455
        %v457 = vpop.f32.mrf.mxu0
        %v458 = vpop.f32.mrf.mxu0
        %v459 = vadd.f32 %v215, %v458
        %v460 = vpop.f32.mrf.mxu0
        %461 = vmatprep.mubr.bf16.mxu0 0
        %462 = vmatmul.mubr.bf16.gmra.mxu0 %v338
        %v463 = vpop.f32.mrf.mxu0
        %v464 = vadd.f32 %v215, %v463
        %v465 = vpop.f32.mrf.mxu0
        %v466 = vpop.f32.mrf.mxu0
        %v467 = vadd.f32 %v215, %v466
        %v468 = vpop.f32.mrf.mxu0
        %469 = vmatprep.mubr.bf16.mxu0 0
        %470 = vmatmul.mubr.bf16.gmra.mxu0 %v341
        %v471 = vpop.f32.mrf.mxu0
        %v472 = vadd.f32 %v215, %v471
        %v473 = vpop.f32.mrf.mxu0
        %v474 = vpop.f32.mrf.mxu0
        %v475 = vadd.f32 %v215, %v474
        %v476 = vpop.f32.mrf.mxu0
        %477 = vmatprep.mubr.bf16.mxu0 0
        %478 = vmatmul.mubr.bf16.gmra.mxu0 %v344
        %v479 = vpop.f32.mrf.mxu0
        %v480 = vadd.f32 %v215, %v479
        %v481 = vpop.f32.mrf.mxu0
        %v482 = vpop.f32.mrf.mxu0
        %v483 = vadd.f32 %v215, %v482
        %v484 = vpop.f32.mrf.mxu0
        %485 = vmatprep.mubr.bf16.mxu0 0
        %486 = vmatmul.mubr.bf16.gmra.mxu0 %v347
        %v487 = vpop.f32.mrf.mxu0
        %v488 = vadd.f32 %v215, %v487
        %v489 = vpop.f32.mrf.mxu0
        %v490 = vpop.f32.mrf.mxu0
        %v491 = vadd.f32 %v215, %v490
        %v492 = vpop.f32.mrf.mxu0
        %493 = vmatprep.mubr.bf16.mxu0 0
        %494 = vmatmul.mubr.bf16.gmra.mxu0 %v350
        %v495 = vpop.f32.mrf.mxu0
        %v496 = vadd.f32 %v215, %v495
        %v497 = vpop.f32.mrf.mxu0
        %v498 = vpop.f32.mrf.mxu0
        %v499 = vadd.f32 %v215, %v498
        %v500 = vpop.f32.mrf.mxu0
        %501 = vmatprep.mubr.bf16.mxu0 0
        %502 = vmatmul.mubr.bf16.gmra.mxu0 %v353
        %v503 = vpop.f32.mrf.mxu0
        %v504 = vadd.f32 %v215, %v503
        %v505 = vpop.f32.mrf.mxu0
        %v506 = vpop.f32.mrf.mxu0
        %v507 = vadd.f32 %v215, %v506
        %v508 = vpop.f32.mrf.mxu0
        %509 = vmatprep.mubr.bf16.mxu0 0
        %510 = vmatmul.mubr.bf16.gmra.mxu0 %v356
        %v511 = vpop.f32.mrf.mxu0
        %v512 = vadd.f32 %v215, %v511
        %v513 = vpop.f32.mrf.mxu0
        %v514 = vpop.f32.mrf.mxu0
        %v515 = vadd.f32 %v215, %v514
        %v516 = vpop.f32.mrf.mxu0
        %517 = vmatprep.mubr.bf16.mxu0 0
        %518 = vmatmul.mubr.bf16.gmra.mxu0 %v359
        %v519 = vpop.f32.mrf.mxu0
        %v520 = vadd.f32 %v215, %v519
        %v521 = vpop.f32.mrf.mxu0
        %v522 = vpop.f32.mrf.mxu0
        %v523 = vadd.f32 %v215, %v522
        %v524 = vpop.f32.mrf.mxu0
        %525 = vdwg.mxu0
        %526 = vst [vmem:[%s164] sm:$0xff] %v400
        %527 = vst [vmem:[%s164 + $0x8] sm:$0xff] %v403
        %528 = vst [vmem:[%s164 + $0x10] sm:$0xff] %v408
        %529 = vst [vmem:[%s164 + $0x18] sm:$0xff] %v411
        %530 = vst [vmem:[%s164 + $0x20] sm:$0xff] %v416
        %531 = vst [vmem:[%s164 + $0x28] sm:$0xff] %v419
        %532 = vst [vmem:[%s164 + $0x30] sm:$0xff] %v424
        %533 = vst [vmem:[%s164 + $0x38] sm:$0xff] %v427
        %534 = vst [vmem:[%s164 + $0x40] sm:$0xff] %v432
        %535 = vst [vmem:[%s164 + $0x48] sm:$0xff] %v435
        %536 = vst [vmem:[%s164 + $0x50] sm:$0xff] %v440
        %537 = vst [vmem:[%s164 + $0x58] sm:$0xff] %v443
        %538 = vst [vmem:[%s164 + $0x60] sm:$0xff] %v448
        %539 = vst [vmem:[%s164 + $0x68] sm:$0xff] %v451
        %540 = vst [vmem:[%s164 + $0x70] sm:$0xff] %v456
        %541 = vst [vmem:[%s164 + $0x78] sm:$0xff] %v459
        %542 = vst [vmem:[%s164 + $0x80] sm:$0xff] %v464
        %543 = vst [vmem:[%s164 + $0x88] sm:$0xff] %v467
        %544 = vst [vmem:[%s164 + $0x90] sm:$0xff] %v472
        %545 = vst [vmem:[%s164 + $0x98] sm:$0xff] %v475
        %546 = vst [vmem:[%s164 + $0xa0] sm:$0xff] %v480
        %547 = vst [vmem:[%s164 + $0xa8] sm:$0xff] %v483
        %548 = vst [vmem:[%s164 + $0xb0] sm:$0xff] %v488
        %549 = vst [vmem:[%s164 + $0xb8] sm:$0xff] %v491
        %550 = vst [vmem:[%s164 + $0xc0] sm:$0xff] %v496
        %551 = vst [vmem:[%s164 + $0xc8] sm:$0xff] %v499
        %552 = vst [vmem:[%s164 + $0xd0] sm:$0xff] %v504
        %553 = vst [vmem:[%s164 + $0xd8] sm:$0xff] %v507
        %554 = vst [vmem:[%s164 + $0xe0] sm:$0xff] %v512
        %555 = vst [vmem:[%s164 + $0xe8] sm:$0xff] %v515
        %556 = vst [vmem:[%s164 + $0xf0] sm:$0xff] %v520
        %557 = vst [vmem:[%s164 + $0xf8] sm:$0xff] %v523
        %s558 = sand.u32 %s93, 1
        %s559 = scalar_lea.sflag [#allocation3], %s558
        %s560 = sand.u32 %s93, 1
        %s561 = smul.addr %s560, 256
        %s562 = scalar_lea.vmem [#allocation2], %s561
        // Predicated region
        $region33: #{tpu_custom_call.1} parent=31 // pred_check
          %p563 = pneg %p103
        $region34: #{tpu_custom_call.1} parent=31 // pred_check_branch
          %565 = sbr.rel (%p563) target = $region36
        $region35: #{tpu_custom_call.1} parent=31 // pred_region
          %s566 = smul.u32 32, %s17
          %s568 = ssub.s32 4096, 4096
          %569 = vsyncadd %s559, %s568
          %s570 = smul.addr %s566, 128
          %s571 = scalar_lea.hbm %s3, %s570
          %s572 = sshll.u32 %s562, 4
          %s573 = int_to_ptr.vmem [resolvable:$true] %s572
          %578 = dma.vmem_to_hbm [thread:$0]  %s573, 4096, %s571, %s559, 128, 128, 8
        $region36: #{tpu_custom_call.1} parent=31 // pred_fallthru
          _
      $region32: #{tpu_custom_call.1} parent=5 // pred_fallthru
        _
      %p579 = scmp.le.s32.totalorder 2, %s12
      // Predicated region
      $region37: #{tpu_custom_call.1} parent=5 // pred_check
        %p580 = pneg %p579
      $region38: #{tpu_custom_call.1} parent=5 // pred_check_branch
        %582 = sbr.rel (%p580) target = $region40
      $region39: #{tpu_custom_call.1} parent=5 // pred_region
        %s583 = ssub.s32 %s12, 2
        // Predicated region
        $region41: #{tpu_custom_call.1} parent=39 // pred_check
          %p584 = pneg %p109
        $region42: #{tpu_custom_call.1} parent=39 // pred_check_branch
          %586 = sbr.rel (%p584) target = $region44
        $region43: #{tpu_custom_call.1} parent=39 // pred_region
          %s587 = sand.u32 %s94, 1
          %s588 = scalar_lea.sflag [#allocation3], %s587
          %s589 = sand.u32 %s94, 1
          %s590 = smul.addr %s589, 256
          %s591 = scalar_lea.vmem [#allocation2], %s590
          %592 = dma.done %s588, 4096
        $region44: #{tpu_custom_call.1} parent=39 // pred_fallthru
          _
      $region40: #{tpu_custom_call.1} parent=5 // pred_fallthru
        _
    $region6: #{tpu_custom_call.1} parent=1 // loop_footer
      %s16 = sadd.s32 1, %s12
    $region7: #{tpu_custom_call.1} parent=1 // loop_footer_branch
      %11 = sbr.rel target = $region3
    $region8: #{tpu_custom_call.1} parent=1 // loop_exit
      _
    %593 = vsyncpa [#allocation3], 1
    %s594 = scalar_lea.sflag [#allocation3], 1
    %595 = vsyncpa %s594, 1

</llo_original>
